<compile_context>
chip_gen: v5e
topology: v5e:2x2
jax: 0.10.0
libtpu: 0.0.40
codegen_flags: <defaults>
</compile_context>

<pallas_src>
import functools

import jax
import jax.numpy as jnp
from jax.experimental import pallas as pl
from jax.experimental.pallas import tpu as pltpu


def _context_linear_kernel(params_ref, x_ref, o_ref, *, nonlinearity=None):
    # params_ref: SMEM (2,) f32 -> [mu, gamma]
    # x_ref / o_ref: VMEM (TB, N, D) block (TB batch elements per grid step).
    mu = params_ref[0]
    gamma = params_ref[1]
    x = x_ref[...].astype(jnp.float32)                # (TB, N, D), f32 math
    set_sum = jnp.sum(x, axis=1, keepdims=True)       # (TB, 1, D) reduce over set axis
    y = mu * x + gamma * set_sum                      # broadcast over N
    if nonlinearity is not None:                      # fused, static flag
        y = nonlinearity(y)
    o_ref[...] = y.astype(o_ref.dtype)


def _choose_tile_batch(B, N, D, max_tile_bytes=4 * 1024 * 1024):
    """Largest divisor TB of B s.t. the f32 (TB, N, D) tile fits the byte
    budget and (when possible) >=2 grid steps remain for megacore sharding."""
    per_batch_bytes = N * D * 4  # compute width is f32
    best = 1
    for tb in range(1, B + 1):
        if B % tb != 0:
            continue
        if tb * per_batch_bytes > max_tile_bytes:
            continue
        if B >= 2 and B // tb < 2:
            continue  # keep at least 2 grid steps (v7x has 2 TensorCores)
        best = tb
    return best


def context_based_linear(x, mu, gamma, nonlinearity=None):
    """x: (B, N, D). mu, gamma: scalar parameters. Returns (B, N, D).

    `nonlinearity` is an optional elementwise jnp-compatible callable
    (e.g. jax.nn.relu); it is fused into the kernel store.
    """
    B, N, D = x.shape
    # Keep params as f32 scalars in SMEM (32-bit scalar path); math is f32.
    params = jnp.stack([jnp.asarray(mu), jnp.asarray(gamma)]).astype(jnp.float32)

    TB = _choose_tile_batch(B, N, D)
    grid = (B // TB,)

    kernel = functools.partial(_context_linear_kernel, nonlinearity=nonlinearity)

    itemsize = jnp.dtype(x.dtype).itemsize
    cost = pl.CostEstimate(
        flops=3 * B * N * D,
        transcendentals=0,
        bytes_accessed=2 * B * N * D * itemsize,
    )

    out = pl.pallas_call(
        kernel,
        out_shape=jax.ShapeDtypeStruct((B, N, D), x.dtype),
        grid_spec=pltpu.PrefetchScalarGridSpec(
            num_scalar_prefetch=0,
            grid=grid,
            in_specs=[
                pl.BlockSpec(memory_space=pltpu.MemorySpace.SMEM),   # [mu, gamma]
                pl.BlockSpec((TB, N, D), lambda b: (b, 0, 0)),       # TB batch elems
            ],
            out_specs=pl.BlockSpec((TB, N, D), lambda b: (b, 0, 0)),
        ),
        compiler_params=pltpu.CompilerParams(
            dimension_semantics=("parallel",),
            vmem_limit_bytes=32 * 1024 * 1024,   # safe on v5e/v6e/v7x
        ),
        cost_estimate=cost,
    )(params, x)
    return out


def _reference(x, mu, gamma, nonlinearity=None):
    """Pure-JAX reference mirroring the PyTorch forward (f32 math)."""
    N = x.shape[1]
    I = jnp.eye(N, dtype=jnp.float32)
    J = jnp.ones((N, N), dtype=jnp.float32)
    weights = mu.astype(jnp.float32) * I + gamma.astype(jnp.float32) * J
    y = jnp.matmul(weights, x.astype(jnp.float32))
    if nonlinearity is not None:
        y = nonlinearity(y)
    return y.astype(x.dtype)


if __name__ == "__main__":
    key = jax.random.PRNGKey(0)
    k_x, k_x2, k_mu, k_gamma = jax.random.split(key, 4)

    # Deterministic parameter init, matching reset_weights(): uniform(-1, 1).
    mu = jax.random.uniform(k_mu, (), minval=-1.0, maxval=1.0)
    gamma = jax.random.uniform(k_gamma, (), minval=-1.0, maxval=1.0)

    # Case 1: small shapes consistent with the module: batch=2,
    # elements_per_set=8, feature dim=128 (lane-aligned). No nonlinearity.
    B, N, D = 2, 8, 128
    x = jax.random.normal(k_x, (B, N, D), dtype=jnp.float32)
    y = jax.block_until_ready(context_based_linear(x, mu, gamma))
    y_ref = _reference(x, mu, gamma)
    assert y.shape == (B, N, D)
    assert jnp.allclose(y, y_ref, atol=1e-5, rtol=1e-5), "mismatch vs reference"

    # Case 2: larger batch to exercise TB > 1 tiling, with a fused
    # nonlinearity (the module's optional nonlinearity path).
    B2, N2, D2 = 16, 8, 128
    x2 = jax.random.normal(k_x2, (B2, N2, D2), dtype=jnp.float32)
    y2 = jax.block_until_ready(
        context_based_linear(x2, mu, gamma, nonlinearity=jax.nn.relu))
    y2_ref = _reference(x2, mu, gamma, nonlinearity=jax.nn.relu)
    assert y2.shape == (B2, N2, D2)
    assert jnp.allclose(y2, y2_ref, atol=1e-5, rtol=1e-5), "mismatch vs reference (relu)"

    print("KERNEL_OK")
</pallas_src>

<mosaic_0001>
module attributes {stable_mosaic.version = 11 : i64} {
  func.func @_context_linear_kernel(%arg0: i32, %arg1: memref<2xf32, #tpu.memory_space<smem>>, %arg2: memref<1x8x128xf32, #tpu.memory_space<vmem>>, %arg3: memref<1x8x128xf32, #tpu.memory_space<vmem>>) attributes {dimension_semantics = [#tpu.dimension_semantics<parallel>], iteration_bounds = array<i64: 2>, scalar_prefetch = 0 : i64, scratch_operands = 0 : i64, tpu.core_type = #tpu.core_type<tc>, window_params = [{transform_indices = @transform_0, window_bounds = array<i64: 2>}, {transform_indices = @transform_1, window_bounds = array<i64: 1, 8, 128>}, {transform_indices = @transform_2, window_bounds = array<i64: 1, 8, 128>}]} {
    %c0 = arith.constant 0 : index
    %0 = memref.load %arg1[%c0] : memref<2xf32, #tpu.memory_space<smem>>
    %c1 = arith.constant 1 : index
    %1 = memref.load %arg1[%c1] : memref<2xf32, #tpu.memory_space<smem>>
    %c0_0 = arith.constant 0 : index
    %c0_1 = arith.constant 0 : index
    %c0_2 = arith.constant 0 : index
    %2 = vector.load %arg2[%c0_0, %c0_1, %c0_2] : memref<1x8x128xf32, #tpu.memory_space<vmem>>, vector<1x8x128xf32>
    %cst = arith.constant dense<0.000000e+00> : vector<1x128xf32>
    %3 = vector.multi_reduction <add>, %2, %cst [1] : vector<1x8x128xf32> to vector<1x128xf32>
    %4 = vector.shape_cast %3 : vector<1x128xf32> to vector<1x1x128xf32>
    %5 = vector.broadcast %0 : f32 to vector<1x8x128xf32>
    %6 = arith.mulf %5, %2 : vector<1x8x128xf32>
    %7 = vector.broadcast %1 : f32 to vector<1x1x128xf32>
    %8 = arith.mulf %7, %4 : vector<1x1x128xf32>
    %9 = vector.broadcast %8 : vector<1x1x128xf32> to vector<1x8x128xf32>
    %10 = arith.addf %6, %9 : vector<1x8x128xf32>
    %c0_3 = arith.constant 0 : index
    %c0_4 = arith.constant 0 : index
    %c0_5 = arith.constant 0 : index
    %11 = vector.load %arg3[%c0_3, %c0_4, %c0_5] : memref<1x8x128xf32, #tpu.memory_space<vmem>>, vector<1x8x128xf32>
    tpu.vector_store %arg3[%c0_3, %c0_4, %c0_5], %10 {strides = array<i32>} : memref<1x8x128xf32, #tpu.memory_space<vmem>>, vector<1x8x128xf32>,
    return
  }
  func.func @transform_0(%arg0: i32) -> i32 {
    %c0_i32 = arith.constant 0 : i32
    %c0_i32_0 = arith.constant 0 : i32
    return %c0_i32 : i32
  }
  func.func @transform_1(%arg0: i32) -> (i32, i32, i32) {
    %c0_i32 = arith.constant 0 : i32
    %c0_i32_0 = arith.constant 0 : i32
    %c0_i32_1 = arith.constant 0 : i32
    return %arg0, %c0_i32, %c0_i32_0 : i32, i32, i32
  }
  func.func @transform_2(%arg0: i32) -> (i32, i32, i32) {
    %c0_i32 = arith.constant 0 : i32
    %c0_i32_0 = arith.constant 0 : i32
    %c0_i32_1 = arith.constant 0 : i32
    return %arg0, %c0_i32, %c0_i32_0 : i32, i32, i32
  }
}

</mosaic_0001>

<llo_original>
// kernel: tpu_custom_call.1
$region0: #{tpu_custom_call.1}
  #allocation0 [shape = 'u32[]', space=smem, size = 0x4, offset = 0x4, fixed_abs, tag = 'smem constant byte address 0x4 - core index']
  #allocation1 [shape = 'u32[72,128]{1,0:T(1,128)}', space=vmem, size = 0x9000, scoped, tag = 'internal scratch']
  %s0 = inlined_call_operand.hbm [shape: f32[2], index: 0, kind: input, shape index: {}]
  %s1 = inlined_call_operand.hbm [shape: f32[2,8,128], index: 1, kind: input, shape index: {}]
  %s2 = inlined_call_operand.hbm [shape: f32[2,8,128], index: 2, kind: output, shape index: {}]
  %s3 = sld [smem:[#allocation0]]
  $region49: #{tpu_custom_call.1} parent=0
    _
  %s5 = ssub.s32 1, %s3
  %s6 = scalar_select 0, %s5, %s3
  $region1: #{tpu_custom_call.1} parent=0
    #allocation2 [shape = 'u8[512]{0}', space=smem, size = 0x200, scoped, tag = 'input window, operand 0, single buffered']
    #allocation3 [shape = 's32[2]{0}', space=sflag, size = 0x8, scoped, tag = 'scoped memory for tpu_custom_call.1']
    #allocation4 [shape = 's32[2]{0}', space=sflag, size = 0x8, scoped, tag = 'scoped memory for tpu_custom_call.1']
    #allocation5 [shape = 's32[2]{0}', space=sflag, size = 0x8, scoped, tag = 'scoped memory for tpu_custom_call.1']
    #allocation6 [shape = 'u8[8192]{0}', space=vmem, size = 0x2000, scoped, tag = 'input window, operand 1']
    #allocation7 [shape = 'u8[8192]{0}', space=vmem, size = 0x2000, scoped, tag = 'output window, operand 0']
    %7 = vsyncpa [#allocation5], 0
    %8 = vsyncpa [#allocation3], 0
    %s9 = scalar_lea.sflag [#allocation3], 1
    %10 = vsyncpa %s9, 0
    %11 = vsyncpa [#allocation4], 0
    %s12 = scalar_lea.sflag [#allocation4], 1
    %13 = vsyncpa %s12, 0
    loop: start=0, step=1, limit=4
    $region2: #{tpu_custom_call.1} parent=1 // loop_pre_header
      _
    $region3: #{tpu_custom_call.1} parent=1 // loop_header
      %s15 = sphi 0, %s19
      %p16 = scmp.ge.s32.totalorder %s15, 4
      %s23 = sphi 0, %s23
      %s25 = sphi 0, %s23
      %s26 = sphi 0, %s25
      %s40 = sphi 0, %s26
      %s46 = sphi 0, %s48
      %s49 = sphi 0, %s46
      %s50 = sphi 0, %s49
      %s66 = sphi 0, %s50
      %s72 = sphi 0, %s74
      %s75 = sphi 0, %s72
      %s76 = sphi 0, %s75
      %s92 = sphi 0, %s76
    $region4: #{tpu_custom_call.1} parent=1 // loop_header_branch
      %18 = sbr.rel (%p16) target = $region8
    $region5: #{tpu_custom_call.1} parent=1 // loop_body
      %s20 = ssub.s32 %s15, 1
      %s21 = ssub.s32 %s15, 2
      %s22 = sadd.s32 %s15, 1
      %s24 = sadd.s32 %s23, 1
      %p27 = scmp.eq.s32.totalorder %s15, 1
      %p28 = scmp.ne.s32.totalorder %s23, %s25
      %p29 = scmp.eq.s32.totalorder %s15, 0
      %p30 = por %p28, %p29
      %p31 = scmp.ne.s32.totalorder %s23, %s25
      %p32 = scmp.eq.s32.totalorder %s20, 1
      %p33 = por %p31, %p32
      %p34 = scmp.ne.s32.totalorder %s25, %s26
      %p35 = scmp.eq.s32.totalorder %s20, 0
      %p36 = por %p34, %p35
      %p37 = scmp.ne.s32.totalorder %s25, %s26
      %p38 = scmp.eq.s32.totalorder %s21, 1
      %p39 = por %p37, %p38
      %p41 = scmp.ne.s32.totalorder %s26, %s40
      %p42 = scmp.eq.s32.totalorder %s21, 0
      %p43 = por %p41, %p42
      %s44 = ssub.s32 %s15, %s22
      %p45 = scmp.eq.s32.totalorder %s44, 0
      %s47 = sadd.s32 %s46, 1
      %s48 = scalar_select %p45, %s46, %s47
      %p51 = pneg %p45
      %p52 = scmp.eq.s32.totalorder %s15, 1
      %p53 = por %p51, %p52
      %p54 = scmp.ne.s32.totalorder %s46, %s49
      %p55 = scmp.eq.s32.totalorder %s15, 0
      %p56 = por %p54, %p55
      %p57 = scmp.ne.s32.totalorder %s46, %s49
      %p58 = scmp.eq.s32.totalorder %s20, 1
      %p59 = por %p57, %p58
      %p60 = scmp.ne.s32.totalorder %s49, %s50
      %p61 = scmp.eq.s32.totalorder %s20, 0
      %p62 = por %p60, %p61
      %p63 = scmp.ne.s32.totalorder %s49, %s50
      %p64 = scmp.eq.s32.totalorder %s21, 1
      %p65 = por %p63, %p64
      %p67 = scmp.ne.s32.totalorder %s50, %s66
      %p68 = scmp.eq.s32.totalorder %s21, 0
      %p69 = por %p67, %p68
      %s70 = ssub.s32 %s15, %s22
      %p71 = scmp.eq.s32.totalorder %s70, 0
      %s73 = sadd.s32 %s72, 1
      %s74 = scalar_select %p71, %s72, %s73
      %p77 = pneg %p71
      %p78 = scmp.eq.s32.totalorder %s15, 1
      %p79 = por %p77, %p78
      %p80 = scmp.ne.s32.totalorder %s72, %s75
      %p81 = scmp.eq.s32.totalorder %s15, 0
      %p82 = por %p80, %p81
      %p83 = scmp.ne.s32.totalorder %s72, %s75
      %p84 = scmp.eq.s32.totalorder %s20, 1
      %p85 = por %p83, %p84
      %p86 = scmp.ne.s32.totalorder %s75, %s76
      %p87 = scmp.eq.s32.totalorder %s20, 0
      %p88 = por %p86, %p87
      %p89 = scmp.ne.s32.totalorder %s75, %s76
      %p90 = scmp.eq.s32.totalorder %s21, 1
      %p91 = por %p89, %p90
      %p93 = scmp.ne.s32.totalorder %s76, %s92
      %p94 = scmp.eq.s32.totalorder %s21, 0
      %p95 = por %p93, %p94
      %p96 = scmp.le.s32.totalorder 1, %s15
      %p97 = scmp.lt.s32.totalorder %s15, 3
      %p98 = pnand %p96, %p97
      %p99 = pneg %p98
      // Predicated region
      $region9: #{tpu_custom_call.1} parent=5 // pred_check
        _
      $region10: #{tpu_custom_call.1} parent=5 // pred_check_branch
        %101 = sbr.rel (%p98) target = $region12
      $region11: #{tpu_custom_call.1} parent=5 // pred_region
        %s102 = ssub.s32 %s15, 1
        // Predicated region
        $region13: #{tpu_custom_call.1} parent=11 // pred_check
          %p103 = pneg %p36
        $region14: #{tpu_custom_call.1} parent=11 // pred_check_branch
          %105 = sbr.rel (%p103) target = $region16
        $region15: #{tpu_custom_call.1} parent=11 // pred_region
          %107 = vsyncadd [#allocation5], 0
          %s109 = sshll.u32 %s0, 4
          %s110 = int_to_ptr.hbm [resolvable:$true] %s109
          %112 = dma.hbm_to_smem %s110, 16, [#allocation2], [#allocation5]
        $region16: #{tpu_custom_call.1} parent=11 // pred_fallthru
          _
      $region12: #{tpu_custom_call.1} parent=5 // pred_fallthru
        _
      %p113 = scmp.lt.s32.totalorder %s15, 2
      // Predicated region
      $region17: #{tpu_custom_call.1} parent=5 // pred_check
        %p114 = pneg %p113
      $region18: #{tpu_custom_call.1} parent=5 // pred_check_branch
        %116 = sbr.rel (%p114) target = $region20
      $region19: #{tpu_custom_call.1} parent=5 // pred_region
        // Predicated region
        $region21: #{tpu_custom_call.1} parent=19 // pred_check
          %p117 = pneg %p56
        $region22: #{tpu_custom_call.1} parent=19 // pred_check_branch
          %119 = sbr.rel (%p117) target = $region24
        $region23: #{tpu_custom_call.1} parent=19 // pred_region
          %s120 = sand.u32 %s46, 1
          %s121 = scalar_lea.sflag [#allocation3], %s120
          %s122 = sand.u32 %s46, 1
          %s123 = smul.addr %s122, 8
          %s124 = scalar_lea.vmem [#allocation6], %s123
          %126 = vsyncadd %s121, 0
          %s127 = smul.addr %s15, 8
          %s128 = scalar_lea.hbm %s1, %s127
          %s130 = sshll.u32 %s128, 4
          %s131 = int_to_ptr.hbm [resolvable:$true] %s130
          %s132 = sshll.u32 %s124, 4
          %s133 = int_to_ptr.vmem [resolvable:$true] %s132
          %135 = dma.hbm_to_vmem [thread:$0]  %s131, 128, %s133, %s121
        $region24: #{tpu_custom_call.1} parent=19 // pred_fallthru
          _
      $region20: #{tpu_custom_call.1} parent=5 // pred_fallthru
        _
      %p136 = scmp.le.s32.totalorder 1, %s15
      %p137 = scmp.lt.s32.totalorder %s15, 3
      %p138 = pnand %p136, %p137
      %p139 = pneg %p138
      // Predicated region
      $region25: #{tpu_custom_call.1} parent=5 // pred_check
        _
      $region26: #{tpu_custom_call.1} parent=5 // pred_check_branch
        %141 = sbr.rel (%p138) target = $region28
      $region27: #{tpu_custom_call.1} parent=5 // pred_region
        %s142 = ssub.s32 %s15, 1
        // Predicated region
        $region29: #{tpu_custom_call.1} parent=27 // pred_check
          %p143 = pneg %p36
        $region30: #{tpu_custom_call.1} parent=27 // pred_check_branch
          %145 = sbr.rel (%p143) target = $region32
        $region31: #{tpu_custom_call.1} parent=27 // pred_region
          %147 = dma.done [#allocation5], 16
        $region32: #{tpu_custom_call.1} parent=27 // pred_fallthru
          _
        %s148 = sand.u32 %s49, 1
        %s149 = scalar_lea.sflag [#allocation3], %s148
        %s150 = sand.u32 %s49, 1
        %s151 = smul.addr %s150, 8
        %s152 = scalar_lea.vmem [#allocation6], %s151
        // Predicated region
        $region33: #{tpu_custom_call.1} parent=27 // pred_check
          %p153 = pneg %p62
        $region34: #{tpu_custom_call.1} parent=27 // pred_check_branch
          %155 = sbr.rel (%p153) target = $region36
        $region35: #{tpu_custom_call.1} parent=27 // pred_region
          %157 = dma.done %s149, 128
        $region36: #{tpu_custom_call.1} parent=27 // pred_fallthru
          _
        %158 = sfence
        %p159 = pneg %p36
        %p160 = pneg %p33
        %s161 = sand.u32 %s49, 1
        %s162 = scalar_lea.sflag [#allocation3], %s161
        %s163 = sand.u32 %s49, 1
        %s164 = smul.addr %s163, 8
        %s165 = scalar_lea.vmem [#allocation6], %s164
        %p166 = pneg %p62
        %p167 = pneg %p59
        %p168 = pneg %p88
        %p169 = pneg %p85
        %s170 = sand.u32 %s75, 1
        %s171 = scalar_lea.sflag [#allocation4], %s170
        %s172 = sand.u32 %s75, 1
        %s173 = smul.addr %s172, 8
        %s174 = scalar_lea.vmem [#allocation7], %s173
        %s175 = sld [smem:[#allocation2]]
        %s176 = sld [smem:[#allocation2 + $0x1]]
        %v177 = vld [vmem:[%s152] sm:$0xff]
        %v178 = vrot.slane %v177, 4
        %v179 = vadd.f32 %v177, %v178
        %v180 = vrot.slane %v179, 2
        %v181 = vadd.f32 %v179, %v180
        %v182 = vrot.slane %v181, 1
        %v183 = vadd.f32 %v181, %v182
        %v184 = vstv %s175
        %v185 = vmul.f32 %v184, %v177
        %v186 = vstv %s176
        %v187 = vmul.f32 %v186, %v183
        %v188 = vadd.f32 %v185, %v187
        %189 = vst [vmem:[%s174] sm:$0xff] %v188
        %s190 = sand.u32 %s75, 1
        %s191 = scalar_lea.sflag [#allocation4], %s190
        %s192 = sand.u32 %s75, 1
        %s193 = smul.addr %s192, 8
        %s194 = scalar_lea.vmem [#allocation7], %s193
        // Predicated region
        $region37: #{tpu_custom_call.1} parent=27 // pred_check
          %p195 = pneg %p85
        $region38: #{tpu_custom_call.1} parent=27 // pred_check_branch
          %197 = sbr.rel (%p195) target = $region40
        $region39: #{tpu_custom_call.1} parent=27 // pred_region
          %199 = vsyncadd %s191, 0
          %s200 = smul.addr %s20, 8
          %s201 = scalar_lea.hbm %s2, %s200
          %s203 = sshll.u32 %s194, 4
          %s204 = int_to_ptr.vmem [resolvable:$true] %s203
          %s205 = sshll.u32 %s201, 4
          %s206 = int_to_ptr.hbm [resolvable:$true] %s205
          %208 = dma.vmem_to_hbm [thread:$0]  %s204, 128, %s206, %s191
        $region40: #{tpu_custom_call.1} parent=27 // pred_fallthru
          _
      $region28: #{tpu_custom_call.1} parent=5 // pred_fallthru
        _
      %p209 = scmp.le.s32.totalorder 2, %s15
      // Predicated region
      $region41: #{tpu_custom_call.1} parent=5 // pred_check
        %p210 = pneg %p209
      $region42: #{tpu_custom_call.1} parent=5 // pred_check_branch
        %212 = sbr.rel (%p210) target = $region44
      $region43: #{tpu_custom_call.1} parent=5 // pred_region
        %s213 = ssub.s32 %s15, 2
        // Predicated region
        $region45: #{tpu_custom_call.1} parent=43 // pred_check
          %p214 = pneg %p91
        $region46: #{tpu_custom_call.1} parent=43 // pred_check_branch
          %216 = sbr.rel (%p214) target = $region48
        $region47: #{tpu_custom_call.1} parent=43 // pred_region
          %s217 = sand.u32 %s76, 1
          %s218 = scalar_lea.sflag [#allocation4], %s217
          %s219 = sand.u32 %s76, 1
          %s220 = smul.addr %s219, 8
          %s221 = scalar_lea.vmem [#allocation7], %s220
          %223 = dma.done %s218, 128
        $region48: #{tpu_custom_call.1} parent=43 // pred_fallthru
          _
      $region44: #{tpu_custom_call.1} parent=5 // pred_fallthru
        _
    $region6: #{tpu_custom_call.1} parent=1 // loop_footer
      %s19 = sadd.s32 1, %s15
    $region7: #{tpu_custom_call.1} parent=1 // loop_footer_branch
      %14 = sbr.rel target = $region3
    $region8: #{tpu_custom_call.1} parent=1 // loop_exit
      _
    %224 = vsyncpa [#allocation3], 1
    %s225 = scalar_lea.sflag [#allocation3], 1
    %226 = vsyncpa %s225, 1
    %227 = vsyncpa [#allocation4], 1
    %s228 = scalar_lea.sflag [#allocation4], 1
    %229 = vsyncpa %s228, 1
    %230 = vsyncpa [#allocation5], 1
    %s231 = scalar_lea.sflag [#allocation5], 1
    %232 = vsyncpa %s231, 1

</llo_original>
